<compile_context>
chip_gen: v6e
topology: v6e:2x2x1
jax: 0.10.0
libtpu: 0.0.40
codegen_flags: <defaults>
</compile_context>

<pallas_src>
import jax
import jax.numpy as jnp
from jax import lax
from jax.experimental import pallas as pl
from jax.experimental.pallas import tpu as pltpu

HIDDEN_DIM = 32
OUTPUT_DIM = 6
NEG_SLOPE = 0.01
BN_EPS = 1e-5

TB_MAX = 8192   # packed rows per grid step (upper bound)


def _round_up(x, m):
    return ((x + m - 1) // m) * m


def _default_pack():
    """PACK=8 fills the 256-deep MXU on v6e/v7x; PACK=4 on v5e keeps loads/VPU
    lane-dense (128 lanes) while halving the wasted block-diagonal f32 MXU work."""
    try:
        kind = jax.devices()[0].device_kind.lower()
    except Exception:
        return 8
    if ("v5 lite" in kind) or ("v5e" in kind) or ("v5litepod" in kind):
        return 4
    return 8


def _ec_kernel(x_ref, w2_ref, b2_ref, w3_ref, b3_ref, o_ref):
    # fc2 (+ folded BatchNorm) -> leaky_relu -> fc3, on one (tb, PACK*H) tile.
    h = jnp.dot(x_ref[...], w2_ref[...], preferred_element_type=jnp.float32)
    h = h + b2_ref[...]
    h = jnp.maximum(h, NEG_SLOPE * h)            # leaky_relu, 2 VALU ops per vreg
    # TODO(synk): training-mode dropout (stochastic masking) not implemented;
    # eval-mode (identity) forward semantics only.
    o_ref[...] = jnp.dot(h, w3_ref[...], preferred_element_type=jnp.float32) + b3_ref[...]


def fold_and_pack_params(params, pack=None):
    """One-time parameter prep (hoisted out of the per-forward path).

    Folds BatchNorm (eval mode, running stats) + b2 into fc2, zero-pads fc3's
    output columns to a multiple of 8 per pack (aligned stores), and builds the
    block-diagonal packed weights / tiled biases.
    """
    if pack is None:
        pack = _default_pack()
    H = params["w2"].shape[0]
    O = params["w3"].shape[1]
    o_pad = _round_up(O, 8)

    scale = params["bn_gamma"] * lax.rsqrt(params["bn_var"] + BN_EPS)        # (1, H)
    w2f = params["w2"] * scale                                               # (H, H)
    b2f = (params["b2"] - params["bn_mean"]) * scale + params["bn_beta"]     # (1, H)

    w3p = jnp.zeros((H, o_pad), jnp.float32).at[:, :O].set(params["w3"])     # (H, o_pad)
    b3p = jnp.zeros((1, o_pad), jnp.float32).at[:, :O].set(params["b3"])     # (1, o_pad)

    eye = jnp.eye(pack, dtype=jnp.float32)
    packed = {
        "w2_big": jnp.kron(eye, w2f),            # (pack*H, pack*H)
        "b2_big": jnp.tile(b2f, (1, pack)),      # (1, pack*H)
        "w3_big": jnp.kron(eye, w3p),            # (pack*H, pack*o_pad)
        "b3_big": jnp.tile(b3p, (1, pack)),      # (1, pack*o_pad)
    }
    packed = jax.tree_util.tree_map(jnp.asarray, packed)   # materialize once
    meta = {"pack": pack, "hidden_dim": H, "output_dim": O, "o_pad": o_pad}
    return packed, meta


def ec_predictor_la(x, packed, meta):
    """Fused forward pass. x: (B, hidden_dim) -> (B, output_dim), float32."""
    x = x.astype(jnp.float32)
    B, H = x.shape
    pack = meta["pack"]
    O = meta["output_dim"]
    o_pad = meta["o_pad"]
    HP, OP = pack * H, pack * o_pad

    # --- lane packing: only pad B to the next multiple of PACK (<= PACK-1 rows);
    #     free reshape when B is already a multiple of PACK ---
    b_pad = _round_up(B, pack)
    if b_pad != B:
        x = jnp.pad(x, ((0, b_pad - B), (0, 0)))
    rows = b_pad // pack
    x_packed = x.reshape(rows, HP)               # contiguous, free reshape

    # --- tile size: big tiles to amortize per-step overhead, but >= 2 grid steps
    #     when possible so both v7x TensorCores get work on the "parallel" axis ---
    half_rows = -(-rows // 2)
    tb = max(8, min(TB_MAX, _round_up(half_rows, 8)))
    n_steps = pl.cdiv(rows, tb)                  # ragged last block handled by masking
    grid = (n_steps,)

    rows_work = n_steps * tb
    flops = 2 * rows_work * HP * (HP + OP)
    bytes_accessed = 4 * (rows * HP + rows * OP + HP * HP + HP * OP + HP + OP)
    vmem_limit = int(
        4 * (2 * tb * HP + 2 * tb * OP + 2 * (HP * HP + HP * OP + HP + OP))
        + (4 << 20)  # headroom
    )

    out_packed = pl.pallas_call(
        _ec_kernel,
        out_shape=jax.ShapeDtypeStruct((rows, OP), jnp.float32),
        grid=grid,
        in_specs=[
            pl.BlockSpec((tb, HP), lambda i: (i, 0)),   # x, pipelined over batch
            pl.BlockSpec((HP, HP), lambda i: (0, 0)),   # block-diag fc2+BN weight (resident)
            pl.BlockSpec((1, HP), lambda i: (0, 0)),    # folded fc2 bias
            pl.BlockSpec((HP, OP), lambda i: (0, 0)),   # block-diag fc3 weight (resident)
            pl.BlockSpec((1, OP), lambda i: (0, 0)),    # fc3 bias
        ],
        out_specs=pl.BlockSpec((tb, OP), lambda i: (i, 0)),
        compiler_params=pltpu.CompilerParams(
            dimension_semantics=("parallel",),
            vmem_limit_bytes=vmem_limit,
        ),
        cost_estimate=pl.CostEstimate(
            flops=flops, transcendentals=0, bytes_accessed=bytes_accessed),
    )(x_packed, packed["w2_big"], packed["b2_big"], packed["w3_big"], packed["b3_big"])

    # un-pack: (rows, PACK*o_pad) -> (b_pad, o_pad) -> first B rows, first O cols
    return out_packed.reshape(b_pad, o_pad)[:B, :O]


def init_params(key, hidden_dim=HIDDEN_DIM, output_dim=OUTPUT_DIM,
                negative_slope=NEG_SLOPE):
    """Deterministic init mirroring ECPredictorLA._initialize_weights.

    Linear weights: kaiming_normal_(mode='fan_out', nonlinearity='leaky_relu')
      gain = sqrt(2 / (1 + negative_slope^2)), std = gain / sqrt(fan_out)
    Biases: 0.  BatchNorm: weight=1, bias=0, running_mean=0, running_var=1.
    Linear weights are stored pre-transposed as (in_features, out_features).
    """
    k2, k3 = jax.random.split(key)
    gain = (2.0 / (1.0 + negative_slope ** 2)) ** 0.5

    std2 = gain / (hidden_dim ** 0.5)        # fc2: fan_out = hidden_dim
    w2 = std2 * jax.random.normal(k2, (hidden_dim, hidden_dim), jnp.float32)

    std3 = gain / (output_dim ** 0.5)        # fc3: fan_out = output_dim
    w3 = std3 * jax.random.normal(k3, (output_dim, hidden_dim), jnp.float32)

    return {
        "w2": w2.T,                                         # (in, out)
        "b2": jnp.zeros((1, hidden_dim), jnp.float32),
        "bn_gamma": jnp.ones((1, hidden_dim), jnp.float32),
        "bn_beta": jnp.zeros((1, hidden_dim), jnp.float32),
        "bn_mean": jnp.zeros((1, hidden_dim), jnp.float32),
        "bn_var": jnp.ones((1, hidden_dim), jnp.float32),
        "w3": w3.T,                                         # (in, out)
        "b3": jnp.zeros((1, output_dim), jnp.float32),
    }


def _reference(x, params):
    """Pure-JAX reference of the same (eval-mode) forward pass, unfused/unpacked."""
    x = x.astype(jnp.float32)
    h = x @ params["w2"] + params["b2"]
    h = (h - params["bn_mean"]) * lax.rsqrt(params["bn_var"] + BN_EPS) \
        * params["bn_gamma"] + params["bn_beta"]
    h = jnp.where(h >= 0.0, h, NEG_SLOPE * h)
    return h @ params["w3"] + params["b3"]


if __name__ == "__main__":
    key = jax.random.PRNGKey(0)
    kp, kx = jax.random.split(key)

    batch = 10   # not a multiple of PACK: exercises the small-pad + ragged-tile path
    params = init_params(kp)
    x = jax.random.normal(kx, (batch, HIDDEN_DIM), jnp.float32)

    # One-time parameter prep (cached outside the per-forward path).
    packed, meta = fold_and_pack_params(params)

    fwd = jax.jit(lambda xv: ec_predictor_la(xv, packed, meta))
    out = fwd(x)
    out = jax.block_until_ready(out)

    ref = _reference(x, params)
    assert out.shape == (batch, OUTPUT_DIM), out.shape
    assert jnp.allclose(out, ref, atol=1e-4, rtol=1e-4), "mismatch vs reference"
    assert not jnp.isnan(out).any(), "NaN detected in kernel output"

    print("KERNEL_OK")
</pallas_src>

<mosaic_0001>
module attributes {stable_mosaic.version = 11 : i64} {
  func.func @_ec_kernel(%arg0: i32, %arg1: memref<8x256xf32, #tpu.memory_space<vmem>>, %arg2: memref<256x256xf32, #tpu.memory_space<vmem>>, %arg3: memref<1x256xf32, #tpu.memory_space<vmem>>, %arg4: memref<256x64xf32, #tpu.memory_space<vmem>>, %arg5: memref<1x64xf32, #tpu.memory_space<vmem>>, %arg6: memref<8x64xf32, #tpu.memory_space<vmem>>) attributes {dimension_semantics = [#tpu.dimension_semantics<parallel>], iteration_bounds = array<i64: 1>, scalar_prefetch = 0 : i64, scratch_operands = 0 : i64, tpu.core_type = #tpu.core_type<tc>, window_params = [{transform_indices = @transform_0, window_bounds = array<i64: 8, 256>}, {pipeline_mode = #tpu.pipeline_mode<synchronous>, transform_indices = @transform_1, window_bounds = array<i64: 256, 256>}, {pipeline_mode = #tpu.pipeline_mode<synchronous>, transform_indices = @transform_2, window_bounds = array<i64: 1, 256>}, {pipeline_mode = #tpu.pipeline_mode<synchronous>, transform_indices = @transform_3, window_bounds = array<i64: 256, 64>}, {pipeline_mode = #tpu.pipeline_mode<synchronous>, transform_indices = @transform_4, window_bounds = array<i64: 1, 64>}, {transform_indices = @transform_5, window_bounds = array<i64: 8, 64>}]} {
    %c0 = arith.constant 0 : index
    %c0_0 = arith.constant 0 : index
    %0 = vector.load %arg1[%c0, %c0_0] : memref<8x256xf32, #tpu.memory_space<vmem>>, vector<8x256xf32>
    %c0_1 = arith.constant 0 : index
    %c0_2 = arith.constant 0 : index
    %1 = vector.load %arg2[%c0_1, %c0_2] : memref<256x256xf32, #tpu.memory_space<vmem>>, vector<256x256xf32>
    %cst = arith.constant dense<0.000000e+00> : vector<8x256xf32>
    %2 = tpu.matmul %0, %1, %cst {dimension_numbers = #tpu.dot_dimension_numbers<[1], [0], [0], [1], [0, 0, 1, 1], [], []>} : vector<8x256xf32>, vector<256x256xf32>, vector<8x256xf32> -> vector<8x256xf32>
    %c0_3 = arith.constant 0 : index
    %c0_4 = arith.constant 0 : index
    %3 = vector.load %arg3[%c0_3, %c0_4] : memref<1x256xf32, #tpu.memory_space<vmem>>, vector<1x256xf32>
    %4 = vector.broadcast %3 : vector<1x256xf32> to vector<8x256xf32>
    %5 = arith.addf %2, %4 : vector<8x256xf32>
    %cst_5 = arith.constant 0.00999999977 : f32
    %6 = vector.broadcast %cst_5 : f32 to vector<8x256xf32>
    %7 = arith.mulf %6, %5 : vector<8x256xf32>
    %8 = arith.maximumf %5, %7 : vector<8x256xf32>
    %c0_6 = arith.constant 0 : index
    %c0_7 = arith.constant 0 : index
    %9 = vector.load %arg4[%c0_6, %c0_7] : memref<256x64xf32, #tpu.memory_space<vmem>>, vector<256x64xf32>
    %cst_8 = arith.constant dense<0.000000e+00> : vector<8x64xf32>
    %10 = tpu.matmul %8, %9, %cst_8 {dimension_numbers = #tpu.dot_dimension_numbers<[1], [0], [0], [1], [0, 0, 1, 1], [], []>} : vector<8x256xf32>, vector<256x64xf32>, vector<8x64xf32> -> vector<8x64xf32>
    %c0_9 = arith.constant 0 : index
    %c0_10 = arith.constant 0 : index
    %11 = vector.load %arg5[%c0_9, %c0_10] : memref<1x64xf32, #tpu.memory_space<vmem>>, vector<1x64xf32>
    %12 = vector.broadcast %11 : vector<1x64xf32> to vector<8x64xf32>
    %13 = arith.addf %10, %12 : vector<8x64xf32>
    %c0_11 = arith.constant 0 : index
    %c0_12 = arith.constant 0 : index
    %14 = vector.load %arg6[%c0_11, %c0_12] : memref<8x64xf32, #tpu.memory_space<vmem>>, vector<8x64xf32>
    tpu.vector_store %arg6[%c0_11, %c0_12], %13 {strides = array<i32>} : memref<8x64xf32, #tpu.memory_space<vmem>>, vector<8x64xf32>,
    return
  }
  func.func @transform_0(%arg0: i32) -> (i32, i32) {
    %c0_i32 = arith.constant 0 : i32
    %c0_i32_0 = arith.constant 0 : i32
    return %arg0, %c0_i32 : i32, i32
  }
  func.func @transform_1(%arg0: i32) -> (i32, i32) {
    %c0_i32 = arith.constant 0 : i32
    %c0_i32_0 = arith.constant 0 : i32
    %c0_i32_1 = arith.constant 0 : i32
    return %c0_i32, %c0_i32_0 : i32, i32
  }
  func.func @transform_2(%arg0: i32) -> (i32, i32) {
    %c0_i32 = arith.constant 0 : i32
    %c0_i32_0 = arith.constant 0 : i32
    %c0_i32_1 = arith.constant 0 : i32
    return %c0_i32, %c0_i32_0 : i32, i32
  }
  func.func @transform_3(%arg0: i32) -> (i32, i32) {
    %c0_i32 = arith.constant 0 : i32
    %c0_i32_0 = arith.constant 0 : i32
    %c0_i32_1 = arith.constant 0 : i32
    return %c0_i32, %c0_i32_0 : i32, i32
  }
  func.func @transform_4(%arg0: i32) -> (i32, i32) {
    %c0_i32 = arith.constant 0 : i32
    %c0_i32_0 = arith.constant 0 : i32
    %c0_i32_1 = arith.constant 0 : i32
    return %c0_i32, %c0_i32_0 : i32, i32
  }
  func.func @transform_5(%arg0: i32) -> (i32, i32) {
    %c0_i32 = arith.constant 0 : i32
    %c0_i32_0 = arith.constant 0 : i32
    return %arg0, %c0_i32 : i32, i32
  }
}

</mosaic_0001>

<llo_original>
// kernel: _lambda_.1
$region0: #{_lambda_.1}
  #allocation0 [shape = 'u32[]', space=smem, size = 0x4, offset = 0x4, fixed_abs, tag = 'smem constant byte address 0x4 - core index']
  #allocation1 [shape = 'u32[144,128]{1,0:T(1,128)}', space=vmem, size = 0x12000, scoped, tag = 'internal scratch']
  %s0 = inlined_call_operand.vmem [shape: f32[2,256], index: 0, kind: input, shape index: {}]
  %s1 = inlined_call_operand.hbm [shape: f32[256,256], index: 1, kind: input, shape index: {}]
  %s2 = inlined_call_operand.vmem [shape: f32[1,256], index: 2, kind: input, shape index: {}]
  %s3 = inlined_call_operand.hbm [shape: f32[256,64], index: 3, kind: input, shape index: {}]
  %s4 = inlined_call_operand.vmem [shape: f32[1,64], index: 4, kind: input, shape index: {}]
  %s5 = inlined_call_operand.vmem [shape: f32[2,64], index: 5, kind: output, shape index: {}]
  %s6 = sld [smem:[#allocation0]]
  $region68: #{_lambda_.1} parent=0
    _
  %s8 = ssub.s32 1, %s6
  %s9 = scalar_select 0, %s8, %s6
  $region1: #{_lambda_.1} parent=0
    #allocation2 [shape = 'u8[262144]{0}', space=vmem, size = 0x40000, scoped, tag = 'input window, operand 1, single buffered']
    #allocation3 [shape = 's32[1]{0}', space=sflag, size = 0x4, scoped, tag = 'scoped memory for _lambda_.1']
    #allocation4 [shape = 'u8[131072]{0}', space=vmem, size = 0x20000, scoped, tag = 'input window, operand 3, single buffered']
    #allocation5 [shape = 's32[1]{0}', space=sflag, size = 0x4, scoped, tag = 'scoped memory for _lambda_.1']
    #allocation6 [shape = 'u8[4096]{0}', space=vmem, size = 0x1000, scoped, tag = 'output window, operand 0, single buffered']
    %10 = vsyncpa [#allocation3], 0
    %11 = vsyncpa [#allocation5], 0
    // Predicated region
    $region2: #{_lambda_.1} parent=1 // pred_check
      _
    $region3: #{_lambda_.1} parent=1 // pred_check_branch
      %13 = sbr.rel (0) target = $region5
    $region4: #{_lambda_.1} parent=1 // pred_region
      _
    $region5: #{_lambda_.1} parent=1 // pred_fallthru
      _
    // Predicated region
    $region6: #{_lambda_.1} parent=1 // pred_check
      _
    $region7: #{_lambda_.1} parent=1 // pred_check_branch
      %15 = sbr.rel (0) target = $region9
    $region8: #{_lambda_.1} parent=1 // pred_region
      %s17 = ssub.s32 8192, 8192
      %18 = vsyncadd [#allocation3], %s17
      %s19 = sshll.u32 [#allocation2], 4
      %s20 = int_to_ptr.vmem [resolvable:$true] %s19
      %25 = dma.hbm_to_vmem [thread:$0]  %s1, 8192, %s20, [#allocation3], 256, 256, 16
    $region9: #{_lambda_.1} parent=1 // pred_fallthru
      _
    // Predicated region
    $region10: #{_lambda_.1} parent=1 // pred_check
      _
    $region11: #{_lambda_.1} parent=1 // pred_check_branch
      %27 = sbr.rel (0) target = $region13
    $region12: #{_lambda_.1} parent=1 // pred_region
      _
    $region13: #{_lambda_.1} parent=1 // pred_fallthru
      _
    // Predicated region
    $region14: #{_lambda_.1} parent=1 // pred_check
      _
    $region15: #{_lambda_.1} parent=1 // pred_check_branch
      %29 = sbr.rel (0) target = $region17
    $region16: #{_lambda_.1} parent=1 // pred_region
      %s31 = ssub.s32 4096, 4096
      %32 = vsyncadd [#allocation5], %s31
      %s33 = sshll.u32 [#allocation4], 4
      %s34 = int_to_ptr.vmem [resolvable:$true] %s33
      %39 = dma.hbm_to_vmem [thread:$0]  %s3, 4096, %s34, [#allocation5], 128, 128, 8
    $region17: #{_lambda_.1} parent=1 // pred_fallthru
      _
    // Predicated region
    $region18: #{_lambda_.1} parent=1 // pred_check
      _
    $region19: #{_lambda_.1} parent=1 // pred_check_branch
      %41 = sbr.rel (0) target = $region21
    $region20: #{_lambda_.1} parent=1 // pred_region
      _
    $region21: #{_lambda_.1} parent=1 // pred_fallthru
      _
    // Predicated region
    $region22: #{_lambda_.1} parent=1 // pred_check
      _
    $region23: #{_lambda_.1} parent=1 // pred_check_branch
      %43 = sbr.rel (0) target = $region25
    $region24: #{_lambda_.1} parent=1 // pred_region
      %44 = dma.done [#allocation3], 8192
    $region25: #{_lambda_.1} parent=1 // pred_fallthru
      _
    // Predicated region
    $region26: #{_lambda_.1} parent=1 // pred_check
      _
    $region27: #{_lambda_.1} parent=1 // pred_check_branch
      %46 = sbr.rel (0) target = $region29
    $region28: #{_lambda_.1} parent=1 // pred_region
      %47 = dma.done [#allocation5], 4096
    $region29: #{_lambda_.1} parent=1 // pred_fallthru
      _
    %v48 = vld [vmem:[%s0] sm:$0xf]
    %v49 = vld [vmem:[%s0 + $0x4] sm:$0xf]
    %v50 = vld [vmem:[%s0 + $0x8] sm:$0xf]
    %v51 = vld [vmem:[%s0 + $0xc] sm:$0xf]
    %v52 = vld [vmem:[#allocation2] sm:$0xff]
    %v53 = vld [vmem:[#allocation2 + $0x8] sm:$0xff]
    %v54 = vld [vmem:[#allocation2 + $0x10] sm:$0xff]
    %v55 = vld [vmem:[#allocation2 + $0x18] sm:$0xff]
    %v56 = vld [vmem:[#allocation2 + $0x20] sm:$0xff]
    %v57 = vld [vmem:[#allocation2 + $0x28] sm:$0xff]
    %v58 = vld [vmem:[#allocation2 + $0x30] sm:$0xff]
    %v59 = vld [vmem:[#allocation2 + $0x38] sm:$0xff]
    %v60 = vld [vmem:[#allocation2 + $0x40] sm:$0xff]
    %v61 = vld [vmem:[#allocation2 + $0x48] sm:$0xff]
    %v62 = vld [vmem:[#allocation2 + $0x50] sm:$0xff]
    %v63 = vld [vmem:[#allocation2 + $0x58] sm:$0xff]
    %v64 = vld [vmem:[#allocation2 + $0x60] sm:$0xff]
    %v65 = vld [vmem:[#allocation2 + $0x68] sm:$0xff]
    %v66 = vld [vmem:[#allocation2 + $0x70] sm:$0xff]
    %v67 = vld [vmem:[#allocation2 + $0x78] sm:$0xff]
    %v68 = vld [vmem:[#allocation2 + $0x80] sm:$0xff]
    %v69 = vld [vmem:[#allocation2 + $0x88] sm:$0xff]
    %v70 = vld [vmem:[#allocation2 + $0x90] sm:$0xff]
    %v71 = vld [vmem:[#allocation2 + $0x98] sm:$0xff]
    %v72 = vld [vmem:[#allocation2 + $0xa0] sm:$0xff]
    %v73 = vld [vmem:[#allocation2 + $0xa8] sm:$0xff]
    %v74 = vld [vmem:[#allocation2 + $0xb0] sm:$0xff]
    %v75 = vld [vmem:[#allocation2 + $0xb8] sm:$0xff]
    %v76 = vld [vmem:[#allocation2 + $0xc0] sm:$0xff]
    %v77 = vld [vmem:[#allocation2 + $0xc8] sm:$0xff]
    %v78 = vld [vmem:[#allocation2 + $0xd0] sm:$0xff]
    %v79 = vld [vmem:[#allocation2 + $0xd8] sm:$0xff]
    %v80 = vld [vmem:[#allocation2 + $0xe0] sm:$0xff]
    %v81 = vld [vmem:[#allocation2 + $0xe8] sm:$0xff]
    %v82 = vld [vmem:[#allocation2 + $0xf0] sm:$0xff]
    %v83 = vld [vmem:[#allocation2 + $0xf8] sm:$0xff]
    %v84 = vld [vmem:[#allocation2 + $0x100] sm:$0xff]
    %v85 = vld [vmem:[#allocation2 + $0x108] sm:$0xff]
    %v86 = vld [vmem:[#allocation2 + $0x110] sm:$0xff]
    %v87 = vld [vmem:[#allocation2 + $0x118] sm:$0xff]
    %v88 = vld [vmem:[#allocation2 + $0x120] sm:$0xff]
    %v89 = vld [vmem:[#allocation2 + $0x128] sm:$0xff]
    %v90 = vld [vmem:[#allocation2 + $0x130] sm:$0xff]
    %v91 = vld [vmem:[#allocation2 + $0x138] sm:$0xff]
    %v92 = vld [vmem:[#allocation2 + $0x140] sm:$0xff]
    %v93 = vld [vmem:[#allocation2 + $0x148] sm:$0xff]
    %v94 = vld [vmem:[#allocation2 + $0x150] sm:$0xff]
    %v95 = vld [vmem:[#allocation2 + $0x158] sm:$0xff]
    %v96 = vld [vmem:[#allocation2 + $0x160] sm:$0xff]
    %v97 = vld [vmem:[#allocation2 + $0x168] sm:$0xff]
    %v98 = vld [vmem:[#allocation2 + $0x170] sm:$0xff]
    %v99 = vld [vmem:[#allocation2 + $0x178] sm:$0xff]
    %v100 = vld [vmem:[#allocation2 + $0x180] sm:$0xff]
    %v101 = vld [vmem:[#allocation2 + $0x188] sm:$0xff]
    %v102 = vld [vmem:[#allocation2 + $0x190] sm:$0xff]
    %v103 = vld [vmem:[#allocation2 + $0x198] sm:$0xff]
    %v104 = vld [vmem:[#allocation2 + $0x1a0] sm:$0xff]
    %v105 = vld [vmem:[#allocation2 + $0x1a8] sm:$0xff]
    %v106 = vld [vmem:[#allocation2 + $0x1b0] sm:$0xff]
    %v107 = vld [vmem:[#allocation2 + $0x1b8] sm:$0xff]
    %v108 = vld [vmem:[#allocation2 + $0x1c0] sm:$0xff]
    %v109 = vld [vmem:[#allocation2 + $0x1c8] sm:$0xff]
    %v110 = vld [vmem:[#allocation2 + $0x1d0] sm:$0xff]
    %v111 = vld [vmem:[#allocation2 + $0x1d8] sm:$0xff]
    %v112 = vld [vmem:[#allocation2 + $0x1e0] sm:$0xff]
    %v113 = vld [vmem:[#allocation2 + $0x1e8] sm:$0xff]
    %v114 = vld [vmem:[#allocation2 + $0x1f0] sm:$0xff]
    %v115 = vld [vmem:[#allocation2 + $0x1f8] sm:$0xff]
    %v116 = vld [vmem:[%s2] sm:$0x3]
    %v118 = vlaneseq
    %v119 = vshrl.u32 %v118, 7
    %v120 = vsub.s32 0, %v119
    %v121 = vrot.slane %v116, %v120
    %v122 = vlaneseq
    %v123 = vshrl.u32 %v122, 7
    %v124 = vsub.s32 1, %v123
    %v125 = vrot.slane %v116, %v124
    %v132 = vcombine.low %v48, %v49
    %v133 = vcombine.low %v50, %v51
    %v135 = vunpack.c.l.s4 1983009808
    %v136 = vunpack.c.0.s8 %v135
    %v137 = vlaneseq
    %v138 = vshrl.u32 %v137, 7
    %v139 = vsub.s32 %v136, %v138
    %v140 = vrot.slane %v132, %v139
    %v142 = vunpack.c.l.s4 1983009808
    %v143 = vunpack.c.0.s8 %v142
    %v144 = vlaneseq
    %v145 = vshrl.u32 %v144, 7
    %v146 = vsub.s32 %v143, %v145
    %v147 = vrot.slane %v133, %v146
    %v148 = vcombine.low %v140, %v147
    %v149 = vcombine.high %v140, %v147
    %152 = vmatprep.subr.mxu0 %v83
    %153 = vmatpush1.msra.mxu0 %v82
    %154 = vmatprep.subr.mxu0 %v81
    %155 = vmatpush1.msra.mxu0 %v80
    %156 = vmatprep.subr.mxu0 %v79
    %157 = vmatpush1.msra.mxu0 %v78
    %158 = vmatprep.subr.mxu0 %v77
    %159 = vmatpush1.msra.mxu0 %v76
    %160 = vmatprep.subr.mxu0 %v75
    %161 = vmatpush1.msra.mxu0 %v74
    %162 = vmatprep.subr.mxu0 %v73
    %163 = vmatpush1.msra.mxu0 %v72
    %164 = vmatprep.subr.mxu0 %v71
    %165 = vmatpush1.msra.mxu0 %v70
    %166 = vmatprep.subr.mxu0 %v69
    %167 = vmatpush1.msra.mxu0 %v68
    %168 = vmatprep.subr.mxu0 %v67
    %169 = vmatpush1.msra.mxu0 %v66
    %170 = vmatprep.subr.mxu0 %v65
    %171 = vmatpush1.msra.mxu0 %v64
    %172 = vmatprep.subr.mxu0 %v63
    %173 = vmatpush1.msra.mxu0 %v62
    %174 = vmatprep.subr.mxu0 %v61
    %175 = vmatpush1.msra.mxu0 %v60
    %176 = vmatprep.subr.mxu0 %v59
    %177 = vmatpush1.msra.mxu0 %v58
    %178 = vmatprep.subr.mxu0 %v57
    %179 = vmatpush1.msra.mxu0 %v56
    %180 = vmatprep.subr.mxu0 %v55
    %181 = vmatpush1.msra.mxu0 %v54
    %182 = vmatprep.subr.mxu0 %v53
    %183 = vmatpush1.msra.mxu0 %v52
    %184 = vmatprep.subr.mxu0 %v115
    %185 = vmatpush2.msra.mxu0 %v114
    %186 = vmatprep.subr.mxu0 %v113
    %187 = vmatpush2.msra.mxu0 %v112
    %188 = vmatprep.subr.mxu0 %v111
    %189 = vmatpush2.msra.mxu0 %v110
    %190 = vmatprep.subr.mxu0 %v109
    %191 = vmatpush2.msra.mxu0 %v108
    %192 = vmatprep.subr.mxu0 %v107
    %193 = vmatpush2.msra.mxu0 %v106
    %194 = vmatprep.subr.mxu0 %v105
    %195 = vmatpush2.msra.mxu0 %v104
    %196 = vmatprep.subr.mxu0 %v103
    %197 = vmatpush2.msra.mxu0 %v102
    %198 = vmatprep.subr.mxu0 %v101
    %199 = vmatpush2.msra.mxu0 %v100
    %200 = vmatprep.subr.mxu0 %v99
    %201 = vmatpush2.msra.mxu0 %v98
    %202 = vmatprep.subr.mxu0 %v97
    %203 = vmatpush2.msra.mxu0 %v96
    %204 = vmatprep.subr.mxu0 %v95
    %205 = vmatpush2.msra.mxu0 %v94
    %206 = vmatprep.subr.mxu0 %v93
    %207 = vmatpush2.msra.mxu0 %v92
    %208 = vmatprep.subr.mxu0 %v91
    %209 = vmatpush2.msra.mxu0 %v90
    %210 = vmatprep.subr.mxu0 %v89
    %211 = vmatpush2.msra.mxu0 %v88
    %212 = vmatprep.subr.mxu0 %v87
    %213 = vmatpush2.msra.mxu0 %v86
    %214 = vmatprep.subr.mxu0 %v85
    %215 = vmatpush2.msra.mxu0 %v84
    %216 = vmatprep.mubr.f32.mxu0 %v149
    %217 = vmatmul.mubr.f32.gmra.mxu0 %v148
    %v218 = vpop.f32.mrf.mxu0
    %v219 = vadd.f32 %v121, %v218
    %v220 = vpop.f32.mrf.mxu0
    %v221 = vadd.f32 %v125, %v220
    %222 = vdwg.mxu0
    %v223 = vmul.f32 %v219, 0.01
    %v224 = vmul.f32 %v221, 0.01
    %v225 = vmax.f32 %v219, %v223
    %v226 = vmax.f32 %v221, %v224
    %v227 = vld [vmem:[#allocation4] sm:$0xff]
    %v228 = vld [vmem:[#allocation4 + $0x8] sm:$0xff]
    %v229 = vld [vmem:[#allocation4 + $0x10] sm:$0xff]
    %v230 = vld [vmem:[#allocation4 + $0x18] sm:$0xff]
    %v231 = vld [vmem:[#allocation4 + $0x20] sm:$0xff]
    %v232 = vld [vmem:[#allocation4 + $0x28] sm:$0xff]
    %v233 = vld [vmem:[#allocation4 + $0x30] sm:$0xff]
    %v234 = vld [vmem:[#allocation4 + $0x38] sm:$0xff]
    %v235 = vld [vmem:[#allocation4 + $0x40] sm:$0xff]
    %v236 = vld [vmem:[#allocation4 + $0x48] sm:$0xff]
    %v237 = vld [vmem:[#allocation4 + $0x50] sm:$0xff]
    %v238 = vld [vmem:[#allocation4 + $0x58] sm:$0xff]
    %v239 = vld [vmem:[#allocation4 + $0x60] sm:$0xff]
    %v240 = vld [vmem:[#allocation4 + $0x68] sm:$0xff]
    %v241 = vld [vmem:[#allocation4 + $0x70] sm:$0xff]
    %v242 = vld [vmem:[#allocation4 + $0x78] sm:$0xff]
    %v243 = vld [vmem:[#allocation4 + $0x80] sm:$0xff]
    %v244 = vld [vmem:[#allocation4 + $0x88] sm:$0xff]
    %v245 = vld [vmem:[#allocation4 + $0x90] sm:$0xff]
    %v246 = vld [vmem:[#allocation4 + $0x98] sm:$0xff]
    %v247 = vld [vmem:[#allocation4 + $0xa0] sm:$0xff]
    %v248 = vld [vmem:[#allocation4 + $0xa8] sm:$0xff]
    %v249 = vld [vmem:[#allocation4 + $0xb0] sm:$0xff]
    %v250 = vld [vmem:[#allocation4 + $0xb8] sm:$0xff]
    %v251 = vld [vmem:[#allocation4 + $0xc0] sm:$0xff]
    %v252 = vld [vmem:[#allocation4 + $0xc8] sm:$0xff]
    %v253 = vld [vmem:[#allocation4 + $0xd0] sm:$0xff]
    %v254 = vld [vmem:[#allocation4 + $0xd8] sm:$0xff]
    %v255 = vld [vmem:[#allocation4 + $0xe0] sm:$0xff]
    %v256 = vld [vmem:[#allocation4 + $0xe8] sm:$0xff]
    %v257 = vld [vmem:[#allocation4 + $0xf0] sm:$0xff]
    %v258 = vld [vmem:[#allocation4 + $0xf8] sm:$0xff]
    %v259 = vld [vmem:[%s4] sm:$0x1]
    %v261 = vlaneseq
    %v262 = vshrl.u32 %v261, 7
    %v263 = vsub.s32 0, %v262
    %v264 = vrot.slane %v259, %v263
    %266 = vmatprep.subr.mxu0 0.0
    %267 = vmatpush1.msra.mxu0 %v242
    %268 = vmatprep.subr.mxu0 0.0
    %269 = vmatpush1.msra.mxu0 %v241
    %270 = vmatprep.subr.mxu0 0.0
    %271 = vmatpush1.msra.mxu0 %v240
    %272 = vmatprep.subr.mxu0 0.0
    %273 = vmatpush1.msra.mxu0 %v239
    %274 = vmatprep.subr.mxu0 0.0
    %275 = vmatpush1.msra.mxu0 %v238
    %276 = vmatprep.subr.mxu0 0.0
    %277 = vmatpush1.msra.mxu0 %v237
    %278 = vmatprep.subr.mxu0 0.0
    %279 = vmatpush1.msra.mxu0 %v236
    %280 = vmatprep.subr.mxu0 0.0
    %281 = vmatpush1.msra.mxu0 %v235
    %282 = vmatprep.subr.mxu0 0.0
    %283 = vmatpush1.msra.mxu0 %v234
    %284 = vmatprep.subr.mxu0 0.0
    %285 = vmatpush1.msra.mxu0 %v233
    %286 = vmatprep.subr.mxu0 0.0
    %287 = vmatpush1.msra.mxu0 %v232
    %288 = vmatprep.subr.mxu0 0.0
    %289 = vmatpush1.msra.mxu0 %v231
    %290 = vmatprep.subr.mxu0 0.0
    %291 = vmatpush1.msra.mxu0 %v230
    %292 = vmatprep.subr.mxu0 0.0
    %293 = vmatpush1.msra.mxu0 %v229
    %294 = vmatprep.subr.mxu0 0.0
    %295 = vmatpush1.msra.mxu0 %v228
    %296 = vmatprep.subr.mxu0 0.0
    %297 = vmatpush1.msra.mxu0 %v227
    %298 = vmatprep.subr.mxu0 0.0
    %299 = vmatpush2.msra.mxu0 %v258
    %300 = vmatprep.subr.mxu0 0.0
    %301 = vmatpush2.msra.mxu0 %v257
    %302 = vmatprep.subr.mxu0 0.0
    %303 = vmatpush2.msra.mxu0 %v256
    %304 = vmatprep.subr.mxu0 0.0
    %305 = vmatpush2.msra.mxu0 %v255
    %306 = vmatprep.subr.mxu0 0.0
    %307 = vmatpush2.msra.mxu0 %v254
    %308 = vmatprep.subr.mxu0 0.0
    %309 = vmatpush2.msra.mxu0 %v253
    %310 = vmatprep.subr.mxu0 0.0
    %311 = vmatpush2.msra.mxu0 %v252
    %312 = vmatprep.subr.mxu0 0.0
    %313 = vmatpush2.msra.mxu0 %v251
    %314 = vmatprep.subr.mxu0 0.0
    %315 = vmatpush2.msra.mxu0 %v250
    %316 = vmatprep.subr.mxu0 0.0
    %317 = vmatpush2.msra.mxu0 %v249
    %318 = vmatprep.subr.mxu0 0.0
    %319 = vmatpush2.msra.mxu0 %v248
    %320 = vmatprep.subr.mxu0 0.0
    %321 = vmatpush2.msra.mxu0 %v247
    %322 = vmatprep.subr.mxu0 0.0
    %323 = vmatpush2.msra.mxu0 %v246
    %324 = vmatprep.subr.mxu0 0.0
    %325 = vmatpush2.msra.mxu0 %v245
    %326 = vmatprep.subr.mxu0 0.0
    %327 = vmatpush2.msra.mxu0 %v244
    %328 = vmatprep.subr.mxu0 0.0
    %329 = vmatpush2.msra.mxu0 %v243
    %330 = vmatprep.mubr.f32.mxu0 %v226
    %331 = vmatmul.mubr.f32.gmra.mxu0 %v225
    %v332 = vpop.f32.mrf.mxu0
    %v333 = vadd.f32 %v264, %v332
    %v334 = vpop.f32.mrf.mxu0
    %335 = vdwg.mxu0
    %vm336 = vcmask 523264
    %337 = vst.msk [vmem:[#allocation6] sm:$0xff] %vm336, %v333
    // Predicated region
    $region30: #{_lambda_.1} parent=1 // pred_check
      _
    $region31: #{_lambda_.1} parent=1 // pred_check_branch
      %339 = sbr.rel (0) target = $region33
    $region32: #{_lambda_.1} parent=1 // pred_region
      // Predicated region
      $region34: #{_lambda_.1} parent=32 // pred_check
        _
      $region35: #{_lambda_.1} parent=32 // pred_check_branch
        %341 = sbr.rel (0) target = $region37
      $region36: #{_lambda_.1} parent=32 // pred_region
        // Predicated region
        $region38: #{_lambda_.1} parent=36 // pred_check
          _
        $region39: #{_lambda_.1} parent=36 // pred_check_branch
          %343 = sbr.rel target = $region41
        $region40: #{_lambda_.1} parent=36 // pred_region
          // Predicated region
          $region53: #{_lambda_.1} parent=40 // pred_check
            _
          $region54: #{_lambda_.1} parent=40 // pred_check_branch
            %359 = sbr.rel (0) target = $region56
          $region55: #{_lambda_.1} parent=40 // pred_region
            %s361 = ssub.s32 4, 1
            loop: start=0, step=1, limit=1
            $region57: #{_lambda_.1} parent=55 // loop_pre_header
              _
            $region58: #{_lambda_.1} parent=55 // loop_header
              %s363 = sphi 0, %s367
              %p364 = scmp.ge.s32.totalorder %s363, 1
              %s368 = sphi [#allocation6], [#allocation6]
              %s369 = sphi %s5, %s5
            $region59: #{_lambda_.1} parent=55 // loop_header_branch
              %366 = sbr.rel (%p364) target = $region63
            $region60: #{_lambda_.1} parent=55 // loop_body
              %v370 = vld [vmem:[%s368] sm:%s361]
              %371 = vst [vmem:[%s369] sm:%s361] %v370
            $region61: #{_lambda_.1} parent=55 // loop_footer
              %s367 = sadd.s32 1, %s363
            $region62: #{_lambda_.1} parent=55 // loop_footer_branch
              %362 = sbr.rel target = $region58
            $region63: #{_lambda_.1} parent=55 // loop_exit
              _
          $region56: #{_lambda_.1} parent=40 // pred_fallthru
            _
        $region41: #{_lambda_.1} parent=36 // pred_fallthru
          _
        // Predicated region
        $region42: #{_lambda_.1} parent=36 // pred_check
          _
        $region43: #{_lambda_.1} parent=36 // pred_check_branch
          %345 = sbr.rel (0) target = $region45
        $region44: #{_lambda_.1} parent=36 // pred_region
          %s347 = ssub.s32 4, 1
          loop: start=0, step=1, limit=1
          $region46: #{_lambda_.1} parent=44 // loop_pre_header
            _
          $region47: #{_lambda_.1} parent=44 // loop_header
            %s349 = sphi 0, %s353
            %p350 = scmp.ge.s32.totalorder %s349, 1
            %s354 = sphi [#allocation6], [#allocation6]
            %s355 = sphi %s5, %s5
          $region48: #{_lambda_.1} parent=44 // loop_header_branch
            %352 = sbr.rel (%p350) target = $region52
          $region49: #{_lambda_.1} parent=44 // loop_body
            %v356 = vld [vmem:[%s354] sm:%s347]
            %357 = vst [vmem:[%s355] sm:%s347] %v356
          $region50: #{_lambda_.1} parent=44 // loop_footer
            %s353 = sadd.s32 1, %s349
          $region51: #{_lambda_.1} parent=44 // loop_footer_branch
            %348 = sbr.rel target = $region47
          $region52: #{_lambda_.1} parent=44 // loop_exit
            _
        $region45: #{_lambda_.1} parent=36 // pred_fallthru
          _
      $region37: #{_lambda_.1} parent=32 // pred_fallthru
        _
      %372 = vnop
    $region33: #{_lambda_.1} parent=1 // pred_fallthru
      _
    // Predicated region
    $region64: #{_lambda_.1} parent=1 // pred_check
      _
    $region65: #{_lambda_.1} parent=1 // pred_check_branch
      %374 = sbr.rel (0) target = $region67
    $region66: #{_lambda_.1} parent=1 // pred_region
      _
    $region67: #{_lambda_.1} parent=1 // pred_fallthru
      _
    %375 = vsyncpa [#allocation3], 1
    %376 = vsyncpa [#allocation5], 1

</llo_original>
